<compile_context>
chip_gen: v5e
topology: v5e:2x2
jax: 0.10.0
libtpu: 0.0.40
codegen_flags: <defaults>
</compile_context>

<pallas_src>
import jax
import jax.numpy as jnp
from jax.experimental import pallas as pl
from jax.experimental.pallas import tpu as pltpu

_LANE = 128
_SUBLANE = 8


def _round_up(x, m):
    return ((x + m - 1) // m) * m


def _mlp_kernel(x_ref, w1_ref, b1_ref, w2_ref, b2_ref, o_ref):
    # Two MXU matmuls (f32 accumulation) + EUP sigmoid on one VMEM-resident tile.
    x = x_ref[...]
    h = jnp.dot(x, w1_ref[...], preferred_element_type=jnp.float32)
    h = jax.nn.sigmoid(h + b1_ref[...])
    out = jnp.dot(h.astype(w2_ref.dtype), w2_ref[...],
                  preferred_element_type=jnp.float32)
    out = out + b2_ref[...]
    o_ref[...] = out.astype(o_ref.dtype)


def prepare_params(w1, b1, w2, b2):
    """One-time layout prep (hoisted out of the per-call hot path):
      - transpose PyTorch (out, in) weights to (in, out) so the kernel is x @ W
      - zero-pad hidden and num_classes up to lane-dense multiples of 128
    Returns (prepared_params, num_classes)."""
    hidden, input_size = w1.shape
    num_classes = w2.shape[0]
    hp = _round_up(hidden, _LANE)
    npad = _round_up(num_classes, _LANE)

    w1_t = jnp.zeros((input_size, hp), w1.dtype).at[:, :hidden].set(w1.T)
    b1_p = jnp.zeros((1, hp), b1.dtype).at[:, :hidden].set(b1)
    w2_t = jnp.zeros((hp, npad), w2.dtype).at[:hidden, :num_classes].set(w2.T)
    b2_p = jnp.zeros((1, npad), b2.dtype).at[:, :num_classes].set(b2)
    return (w1_t, b1_p, w2_t, b2_p), num_classes


def neural_net_forward(x, prepared, num_classes, *, block_m=512):
    """x: (B, input_size) f32.  prepared: output of prepare_params."""
    w1_t, b1_p, w2_t, b2_p = prepared
    B, K = x.shape
    Hp = w1_t.shape[1]
    Np = w2_t.shape[1]

    # Batch tile: multiple of 8 (sublane), capped so double-buffered x/out tiles
    # plus resident weights stay far below VMEM limits on v5e/v6e/v7x.
    tm = min(block_m, _round_up(B, _SUBLANE))
    b_pad = _round_up(B, tm)
    if b_pad != B:
        x = jnp.pad(x, ((0, b_pad - B), (0, 0)))

    flops = 2 * b_pad * K * Hp + 2 * b_pad * Hp * Np
    bytes_accessed = 4 * (b_pad * K + K * Hp + Hp + Hp * Np + Np + b_pad * Np)

    out = pl.pallas_call(
        _mlp_kernel,
        out_shape=jax.ShapeDtypeStruct((b_pad, Np), x.dtype),
        grid=(b_pad // tm,),
        in_specs=[
            pl.BlockSpec((tm, K), lambda i: (i, 0)),     # x: streamed over batch
            pl.BlockSpec((K, Hp), lambda i: (0, 0)),     # w1: VMEM-resident
            pl.BlockSpec((1, Hp), lambda i: (0, 0)),     # b1: VMEM-resident
            pl.BlockSpec((Hp, Np), lambda i: (0, 0)),    # w2: VMEM-resident
            pl.BlockSpec((1, Np), lambda i: (0, 0)),     # b2: VMEM-resident
        ],
        out_specs=pl.BlockSpec((tm, Np), lambda i: (i, 0)),
        compiler_params=pltpu.CompilerParams(
            dimension_semantics=("parallel",),           # megacore split on v7x
            vmem_limit_bytes=64 * 1024 * 1024,
        ),
        cost_estimate=pl.CostEstimate(
            flops=flops, transcendentals=b_pad * Hp,
            bytes_accessed=bytes_accessed),
    )(x, w1_t, b1_p, w2_t, b2_p)

    return out[:B, :num_classes]


def _reference(x, w1, b1, w2, b2):
    h = x @ w1.T + b1
    h = jax.nn.sigmoid(h)
    return h @ w2.T + b2


if __name__ == "__main__":
    batch = 8
    input_size = 32
    hidden_size = 32
    num_classes = 16

    key = jax.random.PRNGKey(0)
    kx, k1, k2, k3, k4 = jax.random.split(key, 5)

    x = jax.random.normal(kx, (batch, input_size), dtype=jnp.float32)
    # PyTorch nn.Linear stores weight as (out, in).
    w1 = jax.random.normal(k1, (hidden_size, input_size), dtype=jnp.float32) * 0.1
    b1 = jax.random.normal(k2, (hidden_size,), dtype=jnp.float32) * 0.1
    w2 = jax.random.normal(k3, (num_classes, hidden_size), dtype=jnp.float32) * 0.1
    b2 = jax.random.normal(k4, (num_classes,), dtype=jnp.float32) * 0.1

    # One-time layout prep (transpose + lane padding), outside the hot path.
    prepared, n_out = prepare_params(w1, b1, w2, b2)

    out = neural_net_forward(x, prepared, n_out)
    jax.block_until_ready(out)

    ref = _reference(x, w1, b1, w2, b2)
    assert out.shape == (batch, num_classes)
    assert jnp.allclose(out, ref, atol=1e-5, rtol=1e-5)

    # NOTE: at these toy sizes the ~0.35 us/step pallas_call overhead dominates;
    # benchmark with realistic batch/hidden sizes before drawing perf conclusions.
    print("KERNEL_OK")
</pallas_src>

<mosaic_0001>
module attributes {stable_mosaic.version = 11 : i64} {
  func.func @_mlp_kernel(%arg0: i32, %arg1: memref<8x32xf32, #tpu.memory_space<vmem>>, %arg2: memref<32x128xf32, #tpu.memory_space<vmem>>, %arg3: memref<1x128xf32, #tpu.memory_space<vmem>>, %arg4: memref<128x128xf32, #tpu.memory_space<vmem>>, %arg5: memref<1x128xf32, #tpu.memory_space<vmem>>, %arg6: memref<8x128xf32, #tpu.memory_space<vmem>>) attributes {dimension_semantics = [#tpu.dimension_semantics<parallel>], iteration_bounds = array<i64: 1>, scalar_prefetch = 0 : i64, scratch_operands = 0 : i64, tpu.core_type = #tpu.core_type<tc>, window_params = [{transform_indices = @transform_0, window_bounds = array<i64: 8, 32>}, {pipeline_mode = #tpu.pipeline_mode<synchronous>, transform_indices = @transform_1, window_bounds = array<i64: 32, 128>}, {pipeline_mode = #tpu.pipeline_mode<synchronous>, transform_indices = @transform_2, window_bounds = array<i64: 1, 128>}, {pipeline_mode = #tpu.pipeline_mode<synchronous>, transform_indices = @transform_3, window_bounds = array<i64: 128, 128>}, {pipeline_mode = #tpu.pipeline_mode<synchronous>, transform_indices = @transform_4, window_bounds = array<i64: 1, 128>}, {transform_indices = @transform_5, window_bounds = array<i64: 8, 128>}]} {
    %c0 = arith.constant 0 : index
    %c0_0 = arith.constant 0 : index
    %0 = vector.load %arg1[%c0, %c0_0] : memref<8x32xf32, #tpu.memory_space<vmem>>, vector<8x32xf32>
    %c0_1 = arith.constant 0 : index
    %c0_2 = arith.constant 0 : index
    %1 = vector.load %arg2[%c0_1, %c0_2] : memref<32x128xf32, #tpu.memory_space<vmem>>, vector<32x128xf32>
    %cst = arith.constant dense<0.000000e+00> : vector<8x128xf32>
    %2 = tpu.matmul %0, %1, %cst {dimension_numbers = #tpu.dot_dimension_numbers<[1], [0], [0], [1], [0, 0, 1, 1], [], []>} : vector<8x32xf32>, vector<32x128xf32>, vector<8x128xf32> -> vector<8x128xf32>
    %c0_3 = arith.constant 0 : index
    %c0_4 = arith.constant 0 : index
    %3 = vector.load %arg3[%c0_3, %c0_4] : memref<1x128xf32, #tpu.memory_space<vmem>>, vector<1x128xf32>
    %4 = vector.broadcast %3 : vector<1x128xf32> to vector<8x128xf32>
    %5 = arith.addf %2, %4 : vector<8x128xf32>
    %6 = arith.negf %5 : vector<8x128xf32>
    %7 = math.exp %6 : vector<8x128xf32>
    %cst_5 = arith.constant 1.000000e+00 : f32
    %8 = vector.broadcast %cst_5 : f32 to vector<8x128xf32>
    %9 = arith.addf %8, %7 : vector<8x128xf32>
    %10 = arith.divf %8, %9 : vector<8x128xf32>
    %c0_6 = arith.constant 0 : index
    %c0_7 = arith.constant 0 : index
    %11 = vector.load %arg4[%c0_6, %c0_7] : memref<128x128xf32, #tpu.memory_space<vmem>>, vector<128x128xf32>
    %cst_8 = arith.constant dense<0.000000e+00> : vector<8x128xf32>
    %12 = tpu.matmul %10, %11, %cst_8 {dimension_numbers = #tpu.dot_dimension_numbers<[1], [0], [0], [1], [0, 0, 1, 1], [], []>} : vector<8x128xf32>, vector<128x128xf32>, vector<8x128xf32> -> vector<8x128xf32>
    %c0_9 = arith.constant 0 : index
    %c0_10 = arith.constant 0 : index
    %13 = vector.load %arg5[%c0_9, %c0_10] : memref<1x128xf32, #tpu.memory_space<vmem>>, vector<1x128xf32>
    %14 = vector.broadcast %13 : vector<1x128xf32> to vector<8x128xf32>
    %15 = arith.addf %12, %14 : vector<8x128xf32>
    %c0_11 = arith.constant 0 : index
    %c0_12 = arith.constant 0 : index
    %16 = vector.load %arg6[%c0_11, %c0_12] : memref<8x128xf32, #tpu.memory_space<vmem>>, vector<8x128xf32>
    tpu.vector_store %arg6[%c0_11, %c0_12], %15 {strides = array<i32>} : memref<8x128xf32, #tpu.memory_space<vmem>>, vector<8x128xf32>,
    return
  }
  func.func @transform_0(%arg0: i32) -> (i32, i32) {
    %c0_i32 = arith.constant 0 : i32
    %c0_i32_0 = arith.constant 0 : i32
    return %arg0, %c0_i32 : i32, i32
  }
  func.func @transform_1(%arg0: i32) -> (i32, i32) {
    %c0_i32 = arith.constant 0 : i32
    %c0_i32_0 = arith.constant 0 : i32
    %c0_i32_1 = arith.constant 0 : i32
    return %c0_i32, %c0_i32_0 : i32, i32
  }
  func.func @transform_2(%arg0: i32) -> (i32, i32) {
    %c0_i32 = arith.constant 0 : i32
    %c0_i32_0 = arith.constant 0 : i32
    %c0_i32_1 = arith.constant 0 : i32
    return %c0_i32, %c0_i32_0 : i32, i32
  }
  func.func @transform_3(%arg0: i32) -> (i32, i32) {
    %c0_i32 = arith.constant 0 : i32
    %c0_i32_0 = arith.constant 0 : i32
    %c0_i32_1 = arith.constant 0 : i32
    return %c0_i32, %c0_i32_0 : i32, i32
  }
  func.func @transform_4(%arg0: i32) -> (i32, i32) {
    %c0_i32 = arith.constant 0 : i32
    %c0_i32_0 = arith.constant 0 : i32
    %c0_i32_1 = arith.constant 0 : i32
    return %c0_i32, %c0_i32_0 : i32, i32
  }
  func.func @transform_5(%arg0: i32) -> (i32, i32) {
    %c0_i32 = arith.constant 0 : i32
    %c0_i32_0 = arith.constant 0 : i32
    return %arg0, %c0_i32 : i32, i32
  }
}

</mosaic_0001>

<llo_original>
// kernel: tpu_custom_call.1
$region0: #{tpu_custom_call.1}
  #allocation0 [shape = 'u32[]', space=smem, size = 0x4, offset = 0x4, fixed_abs, tag = 'smem constant byte address 0x4 - core index']
  #allocation1 [shape = 'u32[72,128]{1,0:T(1,128)}', space=vmem, size = 0x9000, scoped, tag = 'internal scratch']
  %s0 = inlined_call_operand.hbm [shape: f32[8,32], index: 0, kind: input, shape index: {}]
  %s1 = inlined_call_operand.hbm [shape: f32[32,128], index: 1, kind: input, shape index: {}]
  %s2 = inlined_call_operand.vmem [shape: f32[1,128], index: 2, kind: input, shape index: {}]
  %s3 = inlined_call_operand.hbm [shape: f32[128,128], index: 3, kind: input, shape index: {}]
  %s4 = inlined_call_operand.vmem [shape: f32[1,128], index: 4, kind: input, shape index: {}]
  %s5 = inlined_call_operand.hbm [shape: f32[8,128], index: 5, kind: output, shape index: {}]
  %s6 = sld [smem:[#allocation0]]
  $region42: #{tpu_custom_call.1} parent=0
    _
  %s8 = ssub.s32 1, %s6
  %s9 = scalar_select 0, %s8, %s6
  $region1: #{tpu_custom_call.1} parent=0
    #allocation2 [shape = 'u8[4096]{0}', space=vmem, size = 0x1000, scoped, tag = 'input window, operand 0, single buffered']
    #allocation3 [shape = 's32[1]{0}', space=sflag, size = 0x4, scoped, tag = 'scoped memory for tpu_custom_call.1']
    #allocation4 [shape = 's32[1]{0}', space=sflag, size = 0x4, scoped, tag = 'scoped memory for tpu_custom_call.1']
    #allocation5 [shape = 'u8[16384]{0}', space=vmem, size = 0x4000, scoped, tag = 'input window, operand 1, single buffered']
    #allocation6 [shape = 's32[1]{0}', space=sflag, size = 0x4, scoped, tag = 'scoped memory for tpu_custom_call.1']
    #allocation7 [shape = 'u8[65536]{0}', space=vmem, size = 0x10000, scoped, tag = 'input window, operand 3, single buffered']
    #allocation8 [shape = 'u8[4096]{0}', space=vmem, size = 0x1000, scoped, tag = 'output window, operand 0, single buffered']
    %10 = vsyncpa [#allocation3], 0
    %11 = vsyncpa [#allocation6], 0
    %12 = vsyncpa [#allocation4], 0
    // Predicated region
    $region2: #{tpu_custom_call.1} parent=1 // pred_check
      _
    $region3: #{tpu_custom_call.1} parent=1 // pred_check_branch
      %14 = sbr.rel (0) target = $region5
    $region4: #{tpu_custom_call.1} parent=1 // pred_region
      %16 = vsyncadd [#allocation3], 0
      %s18 = sshll.u32 %s0, 4
      %s19 = int_to_ptr.hbm [resolvable:$true] %s18
      %s20 = sshll.u32 [#allocation2], 4
      %s21 = int_to_ptr.vmem [resolvable:$true] %s20
      %23 = dma.hbm_to_vmem [thread:$0]  %s19, 128, %s21, [#allocation3]
    $region5: #{tpu_custom_call.1} parent=1 // pred_fallthru
      _
    // Predicated region
    $region6: #{tpu_custom_call.1} parent=1 // pred_check
      _
    $region7: #{tpu_custom_call.1} parent=1 // pred_check_branch
      %25 = sbr.rel (0) target = $region9
    $region8: #{tpu_custom_call.1} parent=1 // pred_region
      %27 = vsyncadd [#allocation6], 0
      %s28 = sshll.u32 %s1, 4
      %s29 = int_to_ptr.hbm [resolvable:$true] %s28
      %s30 = sshll.u32 [#allocation5], 4
      %s31 = int_to_ptr.vmem [resolvable:$true] %s30
      %36 = dma.hbm_to_vmem [thread:$0]  %s29, 512, %s31, [#allocation6], 128, 128, 8
    $region9: #{tpu_custom_call.1} parent=1 // pred_fallthru
      _
    // Predicated region
    $region10: #{tpu_custom_call.1} parent=1 // pred_check
      _
    $region11: #{tpu_custom_call.1} parent=1 // pred_check_branch
      %38 = sbr.rel (0) target = $region13
    $region12: #{tpu_custom_call.1} parent=1 // pred_region
      _
    $region13: #{tpu_custom_call.1} parent=1 // pred_fallthru
      _
    // Predicated region
    $region14: #{tpu_custom_call.1} parent=1 // pred_check
      _
    $region15: #{tpu_custom_call.1} parent=1 // pred_check_branch
      %40 = sbr.rel (0) target = $region17
    $region16: #{tpu_custom_call.1} parent=1 // pred_region
      %42 = vsyncadd [#allocation6], 0
      %s43 = sshll.u32 %s3, 4
      %s44 = int_to_ptr.hbm [resolvable:$true] %s43
      %s45 = sshll.u32 [#allocation7], 4
      %s46 = int_to_ptr.vmem [resolvable:$true] %s45
      %51 = dma.hbm_to_vmem [thread:$0]  %s44, 2048, %s46, [#allocation6], 128, 128, 8
    $region17: #{tpu_custom_call.1} parent=1 // pred_fallthru
      _
    // Predicated region
    $region18: #{tpu_custom_call.1} parent=1 // pred_check
      _
    $region19: #{tpu_custom_call.1} parent=1 // pred_check_branch
      %53 = sbr.rel (0) target = $region21
    $region20: #{tpu_custom_call.1} parent=1 // pred_region
      _
    $region21: #{tpu_custom_call.1} parent=1 // pred_fallthru
      _
    // Predicated region
    $region22: #{tpu_custom_call.1} parent=1 // pred_check
      _
    $region23: #{tpu_custom_call.1} parent=1 // pred_check_branch
      %55 = sbr.rel (0) target = $region25
    $region24: #{tpu_custom_call.1} parent=1 // pred_region
      %57 = dma.done [#allocation3], 128
    $region25: #{tpu_custom_call.1} parent=1 // pred_fallthru
      _
    // Predicated region
    $region26: #{tpu_custom_call.1} parent=1 // pred_check
      _
    $region27: #{tpu_custom_call.1} parent=1 // pred_check_branch
      %59 = sbr.rel (0) target = $region29
    $region28: #{tpu_custom_call.1} parent=1 // pred_region
      %61 = dma.done [#allocation6], 512
    $region29: #{tpu_custom_call.1} parent=1 // pred_fallthru
      _
    // Predicated region
    $region30: #{tpu_custom_call.1} parent=1 // pred_check
      _
    $region31: #{tpu_custom_call.1} parent=1 // pred_check_branch
      %63 = sbr.rel (0) target = $region33
    $region32: #{tpu_custom_call.1} parent=1 // pred_region
      %65 = dma.done [#allocation6], 2048
    $region33: #{tpu_custom_call.1} parent=1 // pred_fallthru
      _
    %v66 = vld [vmem:[#allocation2] sm:$0xff]
    %v67 = vld [vmem:[#allocation5] sm:$0xff]
    %v68 = vld [vmem:[#allocation5 + $0x8] sm:$0xff]
    %v69 = vld [vmem:[#allocation5 + $0x10] sm:$0xff]
    %v70 = vld [vmem:[#allocation5 + $0x18] sm:$0xff]
    %v71 = vld [vmem:[%s2] sm:$0x1]
    %v73 = vperm.slane %v71, 0
    %vm75 = vcmask 261120
    %v77 = vsel %vm75, %v66, 0
    %79 = vmatpush.msra.mxu0 0.0
    %80 = vmatpush.msra.mxu0 0.0
    %81 = vmatpush.msra.mxu0 0.0
    %82 = vmatpush.msra.mxu0 0.0
    %83 = vmatpush.msra.mxu0 0.0
    %84 = vmatpush.msra.mxu0 0.0
    %85 = vmatpush.msra.mxu0 0.0
    %86 = vmatpush.msra.mxu0 0.0
    %87 = vmatpush.msra.mxu0 0.0
    %88 = vmatpush.msra.mxu0 0.0
    %89 = vmatpush.msra.mxu0 0.0
    %90 = vmatpush.msra.mxu0 0.0
    %91 = vmatpush.msra.mxu0 %v70
    %92 = vmatpush.msra.mxu0 %v69
    %93 = vmatpush.msra.mxu0 %v68
    %94 = vmatpush.msra.mxu0 %v67
    %95 = vmatmul.f32.gmra.mxu0 %v77
    %v96 = vpop.f32.mrf.mxu0
    %v97 = vadd.f32 %v73, %v96
    %98 = vdwg.mxu0
    %v99 = vxor.u32 %v97, 2147483648
    %v100 = vmul.f32 %v99, 1.442695
    %v101 = vpow.pop %v100
    %v102 = vadd.f32 %v101, 1.0
    %v103 = vrcp.pop %v102
    %v104 = vmul.f32 %v102, %v103
    %v105 = vsub.f32 1.0, %v104
    %v106 = vmul.f32 %v103, %v105
    %v107 = vadd.f32 %v103, %v106
    %vm108 = vweird.f32 %v102
    %vm109 = vweird.f32 %v103
    %vm110 = vmor %vm108, %vm109
    %v111 = vsel %vm110, %v103, %v107
    %v112 = vand.u32 2147483647, %v102
    %vm113 = vcmp.eq.f32.partialorder %v112, 8.507059e+37
    %v114 = vand.u32 %v102, 2147483648
    %v115 = vor.u32 1.1754944e-38, %v114
    %v116 = vsel %vm113, %v115, %v111
    %v117 = vmul.f32 1.0, %v116
    %v118 = vld [vmem:[#allocation7] sm:$0xff]
    %v119 = vld [vmem:[#allocation7 + $0x8] sm:$0xff]
    %v120 = vld [vmem:[#allocation7 + $0x10] sm:$0xff]
    %v121 = vld [vmem:[#allocation7 + $0x18] sm:$0xff]
    %v122 = vld [vmem:[#allocation7 + $0x20] sm:$0xff]
    %v123 = vld [vmem:[#allocation7 + $0x28] sm:$0xff]
    %v124 = vld [vmem:[#allocation7 + $0x30] sm:$0xff]
    %v125 = vld [vmem:[#allocation7 + $0x38] sm:$0xff]
    %v126 = vld [vmem:[#allocation7 + $0x40] sm:$0xff]
    %v127 = vld [vmem:[#allocation7 + $0x48] sm:$0xff]
    %v128 = vld [vmem:[#allocation7 + $0x50] sm:$0xff]
    %v129 = vld [vmem:[#allocation7 + $0x58] sm:$0xff]
    %v130 = vld [vmem:[#allocation7 + $0x60] sm:$0xff]
    %v131 = vld [vmem:[#allocation7 + $0x68] sm:$0xff]
    %v132 = vld [vmem:[#allocation7 + $0x70] sm:$0xff]
    %v133 = vld [vmem:[#allocation7 + $0x78] sm:$0xff]
    %v134 = vld [vmem:[%s4] sm:$0x1]
    %v136 = vperm.slane %v134, 0
    %138 = vmatpush.msra.mxu0 %v133
    %139 = vmatpush.msra.mxu0 %v132
    %140 = vmatpush.msra.mxu0 %v131
    %141 = vmatpush.msra.mxu0 %v130
    %142 = vmatpush.msra.mxu0 %v129
    %143 = vmatpush.msra.mxu0 %v128
    %144 = vmatpush.msra.mxu0 %v127
    %145 = vmatpush.msra.mxu0 %v126
    %146 = vmatpush.msra.mxu0 %v125
    %147 = vmatpush.msra.mxu0 %v124
    %148 = vmatpush.msra.mxu0 %v123
    %149 = vmatpush.msra.mxu0 %v122
    %150 = vmatpush.msra.mxu0 %v121
    %151 = vmatpush.msra.mxu0 %v120
    %152 = vmatpush.msra.mxu0 %v119
    %153 = vmatpush.msra.mxu0 %v118
    %154 = vmatmul.f32.gmra.mxu0 %v117
    %v155 = vpop.f32.mrf.mxu0
    %v156 = vadd.f32 %v136, %v155
    %157 = vdwg.mxu0
    %158 = vst [vmem:[#allocation8] sm:$0xff] %v156
    // Predicated region
    $region34: #{tpu_custom_call.1} parent=1 // pred_check
      _
    $region35: #{tpu_custom_call.1} parent=1 // pred_check_branch
      %160 = sbr.rel (0) target = $region37
    $region36: #{tpu_custom_call.1} parent=1 // pred_region
      %162 = vsyncadd [#allocation4], 0
      %s164 = sshll.u32 [#allocation8], 4
      %s165 = int_to_ptr.vmem [resolvable:$true] %s164
      %s166 = sshll.u32 %s5, 4
      %s167 = int_to_ptr.hbm [resolvable:$true] %s166
      %169 = dma.vmem_to_hbm [thread:$0]  %s165, 128, %s167, [#allocation4]
    $region37: #{tpu_custom_call.1} parent=1 // pred_fallthru
      _
    // Predicated region
    $region38: #{tpu_custom_call.1} parent=1 // pred_check
      _
    $region39: #{tpu_custom_call.1} parent=1 // pred_check_branch
      %171 = sbr.rel (0) target = $region41
    $region40: #{tpu_custom_call.1} parent=1 // pred_region
      %173 = dma.done [#allocation4], 128
    $region41: #{tpu_custom_call.1} parent=1 // pred_fallthru
      _
    %174 = vsyncpa [#allocation3], 1
    %175 = vsyncpa [#allocation6], 1
    %176 = vsyncpa [#allocation4], 1

</llo_original>
